<compile_context>
chip_gen: v6e
topology: v6e:2x2x1
jax: 0.10.0
libtpu: 0.0.40
codegen_flags: <defaults>
</compile_context>

<pallas_src>
import jax
import jax.numpy as jnp
from jax.experimental import pallas as pl
from jax.experimental.pallas import tpu as pltpu

IN_FEATURES = 14 * 8 * 8          # 896
LAYER_DIMS = [(IN_FEATURES, 128), (128, 64), (64, 32), (32, 16), (16, 1)]
OUT_PAD = 128                     # lane-dense padded width of the final layer
TM_MAX = 2048                     # batch tile (bf16 streaming)


def _round_up(x, m):
    return ((x + m - 1) // m) * m


def mlp_kernel(x_ref,
               w1_ref, b1_ref,
               w2_ref, b2_ref,
               w3_ref, b3_ref,
               w4_ref, b4_ref,
               w5_ref, b5_ref,
               o_ref):
    # x_ref: (TM, 896) bf16.  All matmuls accumulate in f32 on the MXU; activations
    # are cast back to bf16 between layers (bf16-native MXU path), biases added in f32.
    h = jnp.dot(x_ref[...], w1_ref[...], preferred_element_type=jnp.float32)
    h = jnp.maximum(h + b1_ref[...], 0.0).astype(w2_ref.dtype)          # (TM, 128)

    h = jnp.dot(h, w2_ref[...], preferred_element_type=jnp.float32)
    h = jnp.maximum(h + b2_ref[...], 0.0).astype(w3_ref.dtype)          # (TM, 64)

    h = jnp.dot(h, w3_ref[...], preferred_element_type=jnp.float32)
    h = jnp.maximum(h + b3_ref[...], 0.0).astype(w4_ref.dtype)          # (TM, 32)

    h = jnp.dot(h, w4_ref[...], preferred_element_type=jnp.float32)
    h = jnp.maximum(h + b4_ref[...], 0.0).astype(w5_ref.dtype)          # (TM, 16)

    h = jnp.dot(h, w5_ref[...], preferred_element_type=jnp.float32) + b5_ref[...]
    o_ref[...] = h                                                      # (TM, 128), col 0 is the real output


def new_tensor_bigger_than_biggest_chess_net(x, params, *, compute_dtype=jnp.bfloat16):
    """x: (B, 14, 8, 8) float32 NCHW. params: list of (w, b) with w (in,out), b (1,out).

    Returns (B, 1) float32 matching the PyTorch module (no final ReLU).
    """
    B = x.shape[0]
    x_flat = x.reshape(B, IN_FEATURES).astype(compute_dtype)   # same flatten order as nn.Flatten on NCHW

    # Batch tile: biggest tile up to TM_MAX, sublane-aligned; pad B to a multiple of it.
    tm = min(TM_MAX, _round_up(max(B, 1), 8))
    b_pad = _round_up(B, tm)
    if b_pad != B:
        x_flat = jnp.pad(x_flat, ((0, b_pad - B), (0, 0)))

    # Prepare parameters: weights in compute dtype, biases in f32, last layer lane-padded.
    (w1, b1), (w2, b2), (w3, b3), (w4, b4), (w5, b5) = params
    w5p = jnp.zeros((w5.shape[0], OUT_PAD), w5.dtype).at[:, :1].set(w5)
    b5p = jnp.zeros((1, OUT_PAD), b5.dtype).at[:, :1].set(b5)
    weights = [w.astype(compute_dtype) for w in (w1, w2, w3, w4, w5p)]
    biases = [b.astype(jnp.float32) for b in (b1, b2, b3, b4, b5p)]

    flat_params = []
    param_specs = []
    for w, b in zip(weights, biases):
        flat_params += [w, b]
        # Constant index maps -> parameters are DMA'd once and stay VMEM-resident.
        param_specs += [pl.BlockSpec(w.shape, lambda i: (0, 0)),
                        pl.BlockSpec(b.shape, lambda i: (0, 0))]

    x_spec = pl.BlockSpec((tm, IN_FEATURES), lambda i: (i, 0))
    out_spec = pl.BlockSpec((tm, OUT_PAD), lambda i: (i, 0))

    flops = 2 * b_pad * (IN_FEATURES * 128 + 128 * 64 + 64 * 32 + 32 * 16 + 16 * OUT_PAD)
    param_bytes = sum(int(a.size) * a.dtype.itemsize for a in flat_params)
    bytes_accessed = (b_pad * IN_FEATURES * jnp.dtype(compute_dtype).itemsize
                      + param_bytes
                      + b_pad * OUT_PAD * 4)

    out = pl.pallas_call(
        mlp_kernel,
        out_shape=jax.ShapeDtypeStruct((b_pad, OUT_PAD), jnp.float32),
        grid_spec=pltpu.PrefetchScalarGridSpec(
            num_scalar_prefetch=0,
            grid=(b_pad // tm,),
            in_specs=[x_spec] + param_specs,
            out_specs=out_spec,
        ),
        compiler_params=pltpu.CompilerParams(
            dimension_semantics=("parallel",),
            vmem_limit_bytes=32 * 1024 * 1024,
        ),
        cost_estimate=pl.CostEstimate(
            flops=int(flops), transcendentals=0, bytes_accessed=int(bytes_accessed)),
    )(x_flat, *flat_params)

    return out[:B, :1]


def init_params(key):
    """Deterministic synthetic parameters with the module's shapes.

    Weights stored as (in_features, out_features); biases as (1, out_features).
    """
    params = []
    for fan_in, fan_out in LAYER_DIMS:
        key, kw, kb = jax.random.split(key, 3)
        bound = 1.0 / jnp.sqrt(fan_in)
        w = jax.random.uniform(kw, (fan_in, fan_out), jnp.float32, -bound, bound)
        b = jax.random.uniform(kb, (1, fan_out), jnp.float32, -bound, bound)
        params.append((w, b))
    return params


def reference_forward(x, params):
    """Plain-JAX f32 reference for sanity checking."""
    h = x.reshape(x.shape[0], -1)
    for i, (w, b) in enumerate(params):
        h = h @ w + b
        if i < len(params) - 1:
            h = jnp.maximum(h, 0.0)
    return h


if __name__ == "__main__":
    key = jax.random.PRNGKey(0)
    key, kx = jax.random.split(key)

    # Small, module-consistent input: batch=2, a 14x8x8 "board" tensor (NCHW).
    x = jax.random.normal(kx, (2, 14, 8, 8), jnp.float32)
    params = init_params(key)

    out = new_tensor_bigger_than_biggest_chess_net(x, params)
    out = jax.block_until_ready(out)

    ref = reference_forward(x, params)
    assert out.shape == (2, 1), out.shape
    # bf16 streaming (f32 accumulation) vs f32 reference -> loosened tolerance.
    assert jnp.allclose(out, ref, atol=5e-2, rtol=5e-2), (out, ref)

    print("KERNEL_OK")
</pallas_src>

<mosaic_0001>
module attributes {stable_mosaic.version = 11 : i64} {
  func.func @mlp_kernel(%arg0: i32, %arg1: memref<8x896xbf16, #tpu.memory_space<vmem>>, %arg2: memref<896x128xbf16, #tpu.memory_space<vmem>>, %arg3: memref<1x128xf32, #tpu.memory_space<vmem>>, %arg4: memref<128x64xbf16, #tpu.memory_space<vmem>>, %arg5: memref<1x64xf32, #tpu.memory_space<vmem>>, %arg6: memref<64x32xbf16, #tpu.memory_space<vmem>>, %arg7: memref<1x32xf32, #tpu.memory_space<vmem>>, %arg8: memref<32x16xbf16, #tpu.memory_space<vmem>>, %arg9: memref<1x16xf32, #tpu.memory_space<vmem>>, %arg10: memref<16x128xbf16, #tpu.memory_space<vmem>>, %arg11: memref<1x128xf32, #tpu.memory_space<vmem>>, %arg12: memref<8x128xf32, #tpu.memory_space<vmem>>) attributes {dimension_semantics = [#tpu.dimension_semantics<parallel>], iteration_bounds = array<i64: 1>, scalar_prefetch = 0 : i64, scratch_operands = 0 : i64, tpu.core_type = #tpu.core_type<tc>, window_params = [{transform_indices = @transform_0, window_bounds = array<i64: 8, 896>}, {pipeline_mode = #tpu.pipeline_mode<synchronous>, transform_indices = @transform_1, window_bounds = array<i64: 896, 128>}, {pipeline_mode = #tpu.pipeline_mode<synchronous>, transform_indices = @transform_2, window_bounds = array<i64: 1, 128>}, {pipeline_mode = #tpu.pipeline_mode<synchronous>, transform_indices = @transform_3, window_bounds = array<i64: 128, 64>}, {pipeline_mode = #tpu.pipeline_mode<synchronous>, transform_indices = @transform_4, window_bounds = array<i64: 1, 64>}, {pipeline_mode = #tpu.pipeline_mode<synchronous>, transform_indices = @transform_5, window_bounds = array<i64: 64, 32>}, {pipeline_mode = #tpu.pipeline_mode<synchronous>, transform_indices = @transform_6, window_bounds = array<i64: 1, 32>}, {pipeline_mode = #tpu.pipeline_mode<synchronous>, transform_indices = @transform_7, window_bounds = array<i64: 32, 16>}, {pipeline_mode = #tpu.pipeline_mode<synchronous>, transform_indices = @transform_8, window_bounds = array<i64: 1, 16>}, {pipeline_mode = #tpu.pipeline_mode<synchronous>, transform_indices = @transform_9, window_bounds = array<i64: 16, 128>}, {pipeline_mode = #tpu.pipeline_mode<synchronous>, transform_indices = @transform_10, window_bounds = array<i64: 1, 128>}, {transform_indices = @transform_11, window_bounds = array<i64: 8, 128>}]} {
    %c0 = arith.constant 0 : index
    %c0_0 = arith.constant 0 : index
    %0 = vector.load %arg1[%c0, %c0_0] : memref<8x896xbf16, #tpu.memory_space<vmem>>, vector<8x896xbf16>
    %c0_1 = arith.constant 0 : index
    %c0_2 = arith.constant 0 : index
    %1 = vector.load %arg2[%c0_1, %c0_2] : memref<896x128xbf16, #tpu.memory_space<vmem>>, vector<896x128xbf16>
    %cst = arith.constant dense<0.000000e+00> : vector<8x128xf32>
    %2 = tpu.matmul %0, %1, %cst {dimension_numbers = #tpu.dot_dimension_numbers<[1], [0], [0], [1], [0, 0, 1, 1], [], []>} : vector<8x896xbf16>, vector<896x128xbf16>, vector<8x128xf32> -> vector<8x128xf32>
    %c0_3 = arith.constant 0 : index
    %c0_4 = arith.constant 0 : index
    %3 = vector.load %arg3[%c0_3, %c0_4] : memref<1x128xf32, #tpu.memory_space<vmem>>, vector<1x128xf32>
    %4 = vector.broadcast %3 : vector<1x128xf32> to vector<8x128xf32>
    %5 = arith.addf %2, %4 : vector<8x128xf32>
    %cst_5 = arith.constant 0.000000e+00 : f32
    %6 = vector.broadcast %cst_5 : f32 to vector<8x128xf32>
    %7 = arith.maximumf %5, %6 : vector<8x128xf32>
    %8 = arith.truncf %7 : vector<8x128xf32> to vector<8x128xbf16>
    %c0_6 = arith.constant 0 : index
    %c0_7 = arith.constant 0 : index
    %9 = vector.load %arg4[%c0_6, %c0_7] : memref<128x64xbf16, #tpu.memory_space<vmem>>, vector<128x64xbf16>
    %cst_8 = arith.constant dense<0.000000e+00> : vector<8x64xf32>
    %10 = tpu.matmul %8, %9, %cst_8 {dimension_numbers = #tpu.dot_dimension_numbers<[1], [0], [0], [1], [0, 0, 1, 1], [], []>} : vector<8x128xbf16>, vector<128x64xbf16>, vector<8x64xf32> -> vector<8x64xf32>
    %c0_9 = arith.constant 0 : index
    %c0_10 = arith.constant 0 : index
    %11 = vector.load %arg5[%c0_9, %c0_10] : memref<1x64xf32, #tpu.memory_space<vmem>>, vector<1x64xf32>
    %12 = vector.broadcast %11 : vector<1x64xf32> to vector<8x64xf32>
    %13 = arith.addf %10, %12 : vector<8x64xf32>
    %cst_11 = arith.constant 0.000000e+00 : f32
    %14 = vector.broadcast %cst_11 : f32 to vector<8x64xf32>
    %15 = arith.maximumf %13, %14 : vector<8x64xf32>
    %16 = arith.truncf %15 : vector<8x64xf32> to vector<8x64xbf16>
    %c0_12 = arith.constant 0 : index
    %c0_13 = arith.constant 0 : index
    %17 = vector.load %arg6[%c0_12, %c0_13] : memref<64x32xbf16, #tpu.memory_space<vmem>>, vector<64x32xbf16>
    %cst_14 = arith.constant dense<0.000000e+00> : vector<8x32xf32>
    %18 = tpu.matmul %16, %17, %cst_14 {dimension_numbers = #tpu.dot_dimension_numbers<[1], [0], [0], [1], [0, 0, 1, 1], [], []>} : vector<8x64xbf16>, vector<64x32xbf16>, vector<8x32xf32> -> vector<8x32xf32>
    %c0_15 = arith.constant 0 : index
    %c0_16 = arith.constant 0 : index
    %19 = vector.load %arg7[%c0_15, %c0_16] : memref<1x32xf32, #tpu.memory_space<vmem>>, vector<1x32xf32>
    %20 = vector.broadcast %19 : vector<1x32xf32> to vector<8x32xf32>
    %21 = arith.addf %18, %20 : vector<8x32xf32>
    %cst_17 = arith.constant 0.000000e+00 : f32
    %22 = vector.broadcast %cst_17 : f32 to vector<8x32xf32>
    %23 = arith.maximumf %21, %22 : vector<8x32xf32>
    %24 = arith.truncf %23 : vector<8x32xf32> to vector<8x32xbf16>
    %c0_18 = arith.constant 0 : index
    %c0_19 = arith.constant 0 : index
    %25 = vector.load %arg8[%c0_18, %c0_19] : memref<32x16xbf16, #tpu.memory_space<vmem>>, vector<32x16xbf16>
    %cst_20 = arith.constant dense<0.000000e+00> : vector<8x16xf32>
    %26 = tpu.matmul %24, %25, %cst_20 {dimension_numbers = #tpu.dot_dimension_numbers<[1], [0], [0], [1], [0, 0, 1, 1], [], []>} : vector<8x32xbf16>, vector<32x16xbf16>, vector<8x16xf32> -> vector<8x16xf32>
    %c0_21 = arith.constant 0 : index
    %c0_22 = arith.constant 0 : index
    %27 = vector.load %arg9[%c0_21, %c0_22] : memref<1x16xf32, #tpu.memory_space<vmem>>, vector<1x16xf32>
    %28 = vector.broadcast %27 : vector<1x16xf32> to vector<8x16xf32>
    %29 = arith.addf %26, %28 : vector<8x16xf32>
    %cst_23 = arith.constant 0.000000e+00 : f32
    %30 = vector.broadcast %cst_23 : f32 to vector<8x16xf32>
    %31 = arith.maximumf %29, %30 : vector<8x16xf32>
    %32 = arith.truncf %31 : vector<8x16xf32> to vector<8x16xbf16>
    %c0_24 = arith.constant 0 : index
    %c0_25 = arith.constant 0 : index
    %33 = vector.load %arg10[%c0_24, %c0_25] : memref<16x128xbf16, #tpu.memory_space<vmem>>, vector<16x128xbf16>
    %cst_26 = arith.constant dense<0.000000e+00> : vector<8x128xf32>
    %34 = tpu.matmul %32, %33, %cst_26 {dimension_numbers = #tpu.dot_dimension_numbers<[1], [0], [0], [1], [0, 0, 1, 1], [], []>} : vector<8x16xbf16>, vector<16x128xbf16>, vector<8x128xf32> -> vector<8x128xf32>
    %c0_27 = arith.constant 0 : index
    %c0_28 = arith.constant 0 : index
    %35 = vector.load %arg11[%c0_27, %c0_28] : memref<1x128xf32, #tpu.memory_space<vmem>>, vector<1x128xf32>
    %36 = vector.broadcast %35 : vector<1x128xf32> to vector<8x128xf32>
    %37 = arith.addf %34, %36 : vector<8x128xf32>
    %c0_29 = arith.constant 0 : index
    %c0_30 = arith.constant 0 : index
    %38 = vector.load %arg12[%c0_29, %c0_30] : memref<8x128xf32, #tpu.memory_space<vmem>>, vector<8x128xf32>
    tpu.vector_store %arg12[%c0_29, %c0_30], %37 {strides = array<i32>} : memref<8x128xf32, #tpu.memory_space<vmem>>, vector<8x128xf32>,
    return
  }
  func.func @transform_0(%arg0: i32) -> (i32, i32) {
    %c0_i32 = arith.constant 0 : i32
    %c0_i32_0 = arith.constant 0 : i32
    return %arg0, %c0_i32 : i32, i32
  }
  func.func @transform_1(%arg0: i32) -> (i32, i32) {
    %c0_i32 = arith.constant 0 : i32
    %c0_i32_0 = arith.constant 0 : i32
    %c0_i32_1 = arith.constant 0 : i32
    return %c0_i32, %c0_i32_0 : i32, i32
  }
  func.func @transform_2(%arg0: i32) -> (i32, i32) {
    %c0_i32 = arith.constant 0 : i32
    %c0_i32_0 = arith.constant 0 : i32
    %c0_i32_1 = arith.constant 0 : i32
    return %c0_i32, %c0_i32_0 : i32, i32
  }
  func.func @transform_3(%arg0: i32) -> (i32, i32) {
    %c0_i32 = arith.constant 0 : i32
    %c0_i32_0 = arith.constant 0 : i32
    %c0_i32_1 = arith.constant 0 : i32
    return %c0_i32, %c0_i32_0 : i32, i32
  }
  func.func @transform_4(%arg0: i32) -> (i32, i32) {
    %c0_i32 = arith.constant 0 : i32
    %c0_i32_0 = arith.constant 0 : i32
    %c0_i32_1 = arith.constant 0 : i32
    return %c0_i32, %c0_i32_0 : i32, i32
  }
  func.func @transform_5(%arg0: i32) -> (i32, i32) {
    %c0_i32 = arith.constant 0 : i32
    %c0_i32_0 = arith.constant 0 : i32
    %c0_i32_1 = arith.constant 0 : i32
    return %c0_i32, %c0_i32_0 : i32, i32
  }
  func.func @transform_6(%arg0: i32) -> (i32, i32) {
    %c0_i32 = arith.constant 0 : i32
    %c0_i32_0 = arith.constant 0 : i32
    %c0_i32_1 = arith.constant 0 : i32
    return %c0_i32, %c0_i32_0 : i32, i32
  }
  func.func @transform_7(%arg0: i32) -> (i32, i32) {
    %c0_i32 = arith.constant 0 : i32
    %c0_i32_0 = arith.constant 0 : i32
    %c0_i32_1 = arith.constant 0 : i32
    return %c0_i32, %c0_i32_0 : i32, i32
  }
  func.func @transform_8(%arg0: i32) -> (i32, i32) {
    %c0_i32 = arith.constant 0 : i32
    %c0_i32_0 = arith.constant 0 : i32
    %c0_i32_1 = arith.constant 0 : i32
    return %c0_i32, %c0_i32_0 : i32, i32
  }
  func.func @transform_9(%arg0: i32) -> (i32, i32) {
    %c0_i32 = arith.constant 0 : i32
    %c0_i32_0 = arith.constant 0 : i32
    %c0_i32_1 = arith.constant 0 : i32
    return %c0_i32, %c0_i32_0 : i32, i32
  }
  func.func @transform_10(%arg0: i32) -> (i32, i32) {
    %c0_i32 = arith.constant 0 : i32
    %c0_i32_0 = arith.constant 0 : i32
    %c0_i32_1 = arith.constant 0 : i32
    return %c0_i32, %c0_i32_0 : i32, i32
  }
  func.func @transform_11(%arg0: i32) -> (i32, i32) {
    %c0_i32 = arith.constant 0 : i32
    %c0_i32_0 = arith.constant 0 : i32
    return %arg0, %c0_i32 : i32, i32
  }
}

</mosaic_0001>

<llo_original>
// kernel: tpu_custom_call.1
$region0: #{tpu_custom_call.1}
  #allocation0 [shape = 'u32[]', space=smem, size = 0x4, offset = 0x4, fixed_abs, tag = 'smem constant byte address 0x4 - core index']
  #allocation1 [shape = 'u32[144,128]{1,0:T(1,128)}', space=vmem, size = 0x12000, scoped, tag = 'internal scratch']
  %s0 = inlined_call_operand.vmem [shape: bf16[8,896], index: 0, kind: input, shape index: {}]
  %s1 = inlined_call_operand.hbm [shape: bf16[896,128], index: 1, kind: input, shape index: {}]
  %s2 = inlined_call_operand.vmem [shape: f32[1,128], index: 2, kind: input, shape index: {}]
  %s3 = inlined_call_operand.vmem [shape: bf16[128,64], index: 3, kind: input, shape index: {}]
  %s4 = inlined_call_operand.vmem [shape: f32[1,64], index: 4, kind: input, shape index: {}]
  %s5 = inlined_call_operand.vmem [shape: bf16[64,32], index: 5, kind: input, shape index: {}]
  %s6 = inlined_call_operand.vmem [shape: f32[1,32], index: 6, kind: input, shape index: {}]
  %s7 = inlined_call_operand.vmem [shape: bf16[32,16], index: 7, kind: input, shape index: {}]
  %s8 = inlined_call_operand.vmem [shape: f32[1,16], index: 8, kind: input, shape index: {}]
  %s9 = inlined_call_operand.vmem [shape: bf16[16,128], index: 9, kind: input, shape index: {}]
  %s10 = inlined_call_operand.vmem [shape: f32[1,128], index: 10, kind: input, shape index: {}]
  %s11 = inlined_call_operand.hbm [shape: f32[8,128], index: 11, kind: output, shape index: {}]
  %s12 = sld [smem:[#allocation0]]
  $region58: #{tpu_custom_call.1} parent=0
    _
  %s14 = ssub.s32 1, %s12
  %s15 = scalar_select 0, %s14, %s12
  $region1: #{tpu_custom_call.1} parent=0
    #allocation2 [shape = 'u8[229376]{0}', space=vmem, size = 0x38000, scoped, tag = 'input window, operand 1, single buffered']
    #allocation3 [shape = 's32[1]{0}', space=sflag, size = 0x4, scoped, tag = 'scoped memory for tpu_custom_call.1']
    #allocation4 [shape = 's32[1]{0}', space=sflag, size = 0x4, scoped, tag = 'scoped memory for tpu_custom_call.1']
    #allocation5 [shape = 'u8[4096]{0}', space=vmem, size = 0x1000, scoped, tag = 'output window, operand 0, single buffered']
    %16 = vsyncpa [#allocation3], 0
    %17 = vsyncpa [#allocation4], 0
    // Predicated region
    $region2: #{tpu_custom_call.1} parent=1 // pred_check
      _
    $region3: #{tpu_custom_call.1} parent=1 // pred_check_branch
      %19 = sbr.rel (0) target = $region5
    $region4: #{tpu_custom_call.1} parent=1 // pred_region
      _
    $region5: #{tpu_custom_call.1} parent=1 // pred_fallthru
      _
    // Predicated region
    $region6: #{tpu_custom_call.1} parent=1 // pred_check
      _
    $region7: #{tpu_custom_call.1} parent=1 // pred_check_branch
      %21 = sbr.rel (0) target = $region9
    $region8: #{tpu_custom_call.1} parent=1 // pred_region
      %s23 = ssub.s32 7168, 7168
      %24 = vsyncadd [#allocation3], %s23
      %s25 = sshll.u32 [#allocation2], 4
      %s26 = int_to_ptr.vmem [resolvable:$true] %s25
      %31 = dma.hbm_to_vmem [thread:$0]  %s1, 7168, %s26, [#allocation3], 64, 64, 4
    $region9: #{tpu_custom_call.1} parent=1 // pred_fallthru
      _
    // Predicated region
    $region10: #{tpu_custom_call.1} parent=1 // pred_check
      _
    $region11: #{tpu_custom_call.1} parent=1 // pred_check_branch
      %33 = sbr.rel (0) target = $region13
    $region12: #{tpu_custom_call.1} parent=1 // pred_region
      _
    $region13: #{tpu_custom_call.1} parent=1 // pred_fallthru
      _
    // Predicated region
    $region14: #{tpu_custom_call.1} parent=1 // pred_check
      _
    $region15: #{tpu_custom_call.1} parent=1 // pred_check_branch
      %35 = sbr.rel (0) target = $region17
    $region16: #{tpu_custom_call.1} parent=1 // pred_region
      _
    $region17: #{tpu_custom_call.1} parent=1 // pred_fallthru
      _
    // Predicated region
    $region18: #{tpu_custom_call.1} parent=1 // pred_check
      _
    $region19: #{tpu_custom_call.1} parent=1 // pred_check_branch
      %37 = sbr.rel (0) target = $region21
    $region20: #{tpu_custom_call.1} parent=1 // pred_region
      _
    $region21: #{tpu_custom_call.1} parent=1 // pred_fallthru
      _
    // Predicated region
    $region22: #{tpu_custom_call.1} parent=1 // pred_check
      _
    $region23: #{tpu_custom_call.1} parent=1 // pred_check_branch
      %39 = sbr.rel (0) target = $region25
    $region24: #{tpu_custom_call.1} parent=1 // pred_region
      _
    $region25: #{tpu_custom_call.1} parent=1 // pred_fallthru
      _
    // Predicated region
    $region26: #{tpu_custom_call.1} parent=1 // pred_check
      _
    $region27: #{tpu_custom_call.1} parent=1 // pred_check_branch
      %41 = sbr.rel (0) target = $region29
    $region28: #{tpu_custom_call.1} parent=1 // pred_region
      _
    $region29: #{tpu_custom_call.1} parent=1 // pred_fallthru
      _
    // Predicated region
    $region30: #{tpu_custom_call.1} parent=1 // pred_check
      _
    $region31: #{tpu_custom_call.1} parent=1 // pred_check_branch
      %43 = sbr.rel (0) target = $region33
    $region32: #{tpu_custom_call.1} parent=1 // pred_region
      _
    $region33: #{tpu_custom_call.1} parent=1 // pred_fallthru
      _
    // Predicated region
    $region34: #{tpu_custom_call.1} parent=1 // pred_check
      _
    $region35: #{tpu_custom_call.1} parent=1 // pred_check_branch
      %45 = sbr.rel (0) target = $region37
    $region36: #{tpu_custom_call.1} parent=1 // pred_region
      _
    $region37: #{tpu_custom_call.1} parent=1 // pred_fallthru
      _
    // Predicated region
    $region38: #{tpu_custom_call.1} parent=1 // pred_check
      _
    $region39: #{tpu_custom_call.1} parent=1 // pred_check_branch
      %47 = sbr.rel (0) target = $region41
    $region40: #{tpu_custom_call.1} parent=1 // pred_region
      _
    $region41: #{tpu_custom_call.1} parent=1 // pred_fallthru
      _
    // Predicated region
    $region42: #{tpu_custom_call.1} parent=1 // pred_check
      _
    $region43: #{tpu_custom_call.1} parent=1 // pred_check_branch
      %49 = sbr.rel (0) target = $region45
    $region44: #{tpu_custom_call.1} parent=1 // pred_region
      _
    $region45: #{tpu_custom_call.1} parent=1 // pred_fallthru
      _
    // Predicated region
    $region46: #{tpu_custom_call.1} parent=1 // pred_check
      _
    $region47: #{tpu_custom_call.1} parent=1 // pred_check_branch
      %51 = sbr.rel (0) target = $region49
    $region48: #{tpu_custom_call.1} parent=1 // pred_region
      %52 = dma.done [#allocation3], 7168
    $region49: #{tpu_custom_call.1} parent=1 // pred_fallthru
      _
    %v54 = vld [vmem:[%s0] sm:$0xff]
    %v55 = vld [vmem:[%s0 + $0x8] sm:$0xff]
    %v56 = vld [vmem:[%s0 + $0x10] sm:$0xff]
    %v57 = vld [vmem:[%s0 + $0x18] sm:$0xf]
    %v58 = vld [vmem:[#allocation2] sm:$0xf]
    %v59 = vld [vmem:[#allocation2 + $0x4] sm:$0xf]
    %v60 = vld [vmem:[#allocation2 + $0x8] sm:$0xf]
    %v61 = vld [vmem:[#allocation2 + $0xc] sm:$0xf]
    %v62 = vld [vmem:[#allocation2 + $0x10] sm:$0xf]
    %v63 = vld [vmem:[#allocation2 + $0x14] sm:$0xf]
    %v64 = vld [vmem:[#allocation2 + $0x18] sm:$0xf]
    %v65 = vld [vmem:[#allocation2 + $0x1c] sm:$0xf]
    %v66 = vld [vmem:[#allocation2 + $0x20] sm:$0xf]
    %v67 = vld [vmem:[#allocation2 + $0x24] sm:$0xf]
    %v68 = vld [vmem:[#allocation2 + $0x28] sm:$0xf]
    %v69 = vld [vmem:[#allocation2 + $0x2c] sm:$0xf]
    %v70 = vld [vmem:[#allocation2 + $0x30] sm:$0xf]
    %v71 = vld [vmem:[#allocation2 + $0x34] sm:$0xf]
    %v72 = vld [vmem:[#allocation2 + $0x38] sm:$0xf]
    %v73 = vld [vmem:[#allocation2 + $0x3c] sm:$0xf]
    %v74 = vld [vmem:[#allocation2 + $0x40] sm:$0xf]
    %v75 = vld [vmem:[#allocation2 + $0x44] sm:$0xf]
    %v76 = vld [vmem:[#allocation2 + $0x48] sm:$0xf]
    %v77 = vld [vmem:[#allocation2 + $0x4c] sm:$0xf]
    %v78 = vld [vmem:[#allocation2 + $0x50] sm:$0xf]
    %v79 = vld [vmem:[#allocation2 + $0x54] sm:$0xf]
    %v80 = vld [vmem:[#allocation2 + $0x58] sm:$0xf]
    %v81 = vld [vmem:[#allocation2 + $0x5c] sm:$0xf]
    %v82 = vld [vmem:[#allocation2 + $0x60] sm:$0xf]
    %v83 = vld [vmem:[#allocation2 + $0x64] sm:$0xf]
    %v84 = vld [vmem:[#allocation2 + $0x68] sm:$0xf]
    %v85 = vld [vmem:[#allocation2 + $0x6c] sm:$0xf]
    %v86 = vld [vmem:[#allocation2 + $0x70] sm:$0xf]
    %v87 = vld [vmem:[#allocation2 + $0x74] sm:$0xf]
    %v88 = vld [vmem:[#allocation2 + $0x78] sm:$0xf]
    %v89 = vld [vmem:[#allocation2 + $0x7c] sm:$0xf]
    %v90 = vld [vmem:[#allocation2 + $0x80] sm:$0xf]
    %v91 = vld [vmem:[#allocation2 + $0x84] sm:$0xf]
    %v92 = vld [vmem:[#allocation2 + $0x88] sm:$0xf]
    %v93 = vld [vmem:[#allocation2 + $0x8c] sm:$0xf]
    %v94 = vld [vmem:[#allocation2 + $0x90] sm:$0xf]
    %v95 = vld [vmem:[#allocation2 + $0x94] sm:$0xf]
    %v96 = vld [vmem:[#allocation2 + $0x98] sm:$0xf]
    %v97 = vld [vmem:[#allocation2 + $0x9c] sm:$0xf]
    %v98 = vld [vmem:[#allocation2 + $0xa0] sm:$0xf]
    %v99 = vld [vmem:[#allocation2 + $0xa4] sm:$0xf]
    %v100 = vld [vmem:[#allocation2 + $0xa8] sm:$0xf]
    %v101 = vld [vmem:[#allocation2 + $0xac] sm:$0xf]
    %v102 = vld [vmem:[#allocation2 + $0xb0] sm:$0xf]
    %v103 = vld [vmem:[#allocation2 + $0xb4] sm:$0xf]
    %v104 = vld [vmem:[#allocation2 + $0xb8] sm:$0xf]
    %v105 = vld [vmem:[#allocation2 + $0xbc] sm:$0xf]
    %v106 = vld [vmem:[#allocation2 + $0xc0] sm:$0xf]
    %v107 = vld [vmem:[#allocation2 + $0xc4] sm:$0xf]
    %v108 = vld [vmem:[#allocation2 + $0xc8] sm:$0xf]
    %v109 = vld [vmem:[#allocation2 + $0xcc] sm:$0xf]
    %v110 = vld [vmem:[#allocation2 + $0xd0] sm:$0xf]
    %v111 = vld [vmem:[#allocation2 + $0xd4] sm:$0xf]
    %v112 = vld [vmem:[#allocation2 + $0xd8] sm:$0xf]
    %v113 = vld [vmem:[#allocation2 + $0xdc] sm:$0xf]
    %v114 = vld [vmem:[#allocation2 + $0xe0] sm:$0xf]
    %v115 = vld [vmem:[#allocation2 + $0xe4] sm:$0xf]
    %v116 = vld [vmem:[#allocation2 + $0xe8] sm:$0xf]
    %v117 = vld [vmem:[#allocation2 + $0xec] sm:$0xf]
    %v118 = vld [vmem:[#allocation2 + $0xf0] sm:$0xf]
    %v119 = vld [vmem:[#allocation2 + $0xf4] sm:$0xf]
    %v120 = vld [vmem:[#allocation2 + $0xf8] sm:$0xf]
    %v121 = vld [vmem:[#allocation2 + $0xfc] sm:$0xf]
    %v122 = vld [vmem:[#allocation2 + $0x100] sm:$0xf]
    %v123 = vld [vmem:[#allocation2 + $0x104] sm:$0xf]
    %v124 = vld [vmem:[#allocation2 + $0x108] sm:$0xf]
    %v125 = vld [vmem:[#allocation2 + $0x10c] sm:$0xf]
    %v126 = vld [vmem:[#allocation2 + $0x110] sm:$0xf]
    %v127 = vld [vmem:[#allocation2 + $0x114] sm:$0xf]
    %v128 = vld [vmem:[#allocation2 + $0x118] sm:$0xf]
    %v129 = vld [vmem:[#allocation2 + $0x11c] sm:$0xf]
    %v130 = vld [vmem:[#allocation2 + $0x120] sm:$0xf]
    %v131 = vld [vmem:[#allocation2 + $0x124] sm:$0xf]
    %v132 = vld [vmem:[#allocation2 + $0x128] sm:$0xf]
    %v133 = vld [vmem:[#allocation2 + $0x12c] sm:$0xf]
    %v134 = vld [vmem:[#allocation2 + $0x130] sm:$0xf]
    %v135 = vld [vmem:[#allocation2 + $0x134] sm:$0xf]
    %v136 = vld [vmem:[#allocation2 + $0x138] sm:$0xf]
    %v137 = vld [vmem:[#allocation2 + $0x13c] sm:$0xf]
    %v138 = vld [vmem:[#allocation2 + $0x140] sm:$0xf]
    %v139 = vld [vmem:[#allocation2 + $0x144] sm:$0xf]
    %v140 = vld [vmem:[#allocation2 + $0x148] sm:$0xf]
    %v141 = vld [vmem:[#allocation2 + $0x14c] sm:$0xf]
    %v142 = vld [vmem:[#allocation2 + $0x150] sm:$0xf]
    %v143 = vld [vmem:[#allocation2 + $0x154] sm:$0xf]
    %v144 = vld [vmem:[#allocation2 + $0x158] sm:$0xf]
    %v145 = vld [vmem:[#allocation2 + $0x15c] sm:$0xf]
    %v146 = vld [vmem:[#allocation2 + $0x160] sm:$0xf]
    %v147 = vld [vmem:[#allocation2 + $0x164] sm:$0xf]
    %v148 = vld [vmem:[#allocation2 + $0x168] sm:$0xf]
    %v149 = vld [vmem:[#allocation2 + $0x16c] sm:$0xf]
    %v150 = vld [vmem:[#allocation2 + $0x170] sm:$0xf]
    %v151 = vld [vmem:[#allocation2 + $0x174] sm:$0xf]
    %v152 = vld [vmem:[#allocation2 + $0x178] sm:$0xf]
    %v153 = vld [vmem:[#allocation2 + $0x17c] sm:$0xf]
    %v154 = vld [vmem:[#allocation2 + $0x180] sm:$0xf]
    %v155 = vld [vmem:[#allocation2 + $0x184] sm:$0xf]
    %v156 = vld [vmem:[#allocation2 + $0x188] sm:$0xf]
    %v157 = vld [vmem:[#allocation2 + $0x18c] sm:$0xf]
    %v158 = vld [vmem:[#allocation2 + $0x190] sm:$0xf]
    %v159 = vld [vmem:[#allocation2 + $0x194] sm:$0xf]
    %v160 = vld [vmem:[#allocation2 + $0x198] sm:$0xf]
    %v161 = vld [vmem:[#allocation2 + $0x19c] sm:$0xf]
    %v162 = vld [vmem:[#allocation2 + $0x1a0] sm:$0xf]
    %v163 = vld [vmem:[#allocation2 + $0x1a4] sm:$0xf]
    %v164 = vld [vmem:[#allocation2 + $0x1a8] sm:$0xf]
    %v165 = vld [vmem:[#allocation2 + $0x1ac] sm:$0xf]
    %v166 = vld [vmem:[#allocation2 + $0x1b0] sm:$0xf]
    %v167 = vld [vmem:[#allocation2 + $0x1b4] sm:$0xf]
    %v168 = vld [vmem:[#allocation2 + $0x1b8] sm:$0xf]
    %v169 = vld [vmem:[#allocation2 + $0x1bc] sm:$0xf]
    %v170 = vld [vmem:[%s2] sm:$0x1]
    %v172 = vlaneseq
    %v173 = vshrl.u32 %v172, 7
    %v174 = vsub.s32 0, %v173
    %v175 = vrot.slane %v170, %v174
    %v181 = vunpack.c.l.b16 %v54
    %v182 = vunpack.c.h.b16 %v54
    %v183 = vunpack.c.l.b16 %v55
    %v184 = vunpack.c.h.b16 %v55
    %v185 = vunpack.c.l.b16 %v56
    %v186 = vunpack.c.h.b16 %v56
    %v187 = vunpack.c.l.b16 %v57
    %v188 = vpack.c.b16 %v181, %v181
    %v189 = vpack.c.b16 %v182, %v182
    %v190 = vpack.c.b16 %v183, %v183
    %v191 = vpack.c.b16 %v184, %v184
    %v192 = vpack.c.b16 %v185, %v185
    %v193 = vpack.c.b16 %v186, %v186
    %v194 = vpack.c.b16 %v187, %v187
    %v314 = vunpack.c.l.b16 %v58
    %v315 = vunpack.c.l.b16 %v59
    %v316 = vunpack.c.l.b16 %v60
    %v317 = vunpack.c.l.b16 %v61
    %v318 = vunpack.c.l.b16 %v62
    %v319 = vunpack.c.l.b16 %v63
    %v320 = vunpack.c.l.b16 %v64
    %v321 = vunpack.c.l.b16 %v65
    %v322 = vunpack.c.l.b16 %v66
    %v323 = vunpack.c.l.b16 %v67
    %v324 = vunpack.c.l.b16 %v68
    %v325 = vunpack.c.l.b16 %v69
    %v326 = vunpack.c.l.b16 %v70
    %v327 = vunpack.c.l.b16 %v71
    %v328 = vunpack.c.l.b16 %v72
    %v329 = vunpack.c.l.b16 %v73
    %v330 = vunpack.c.l.b16 %v74
    %v331 = vunpack.c.l.b16 %v75
    %v332 = vunpack.c.l.b16 %v76
    %v333 = vunpack.c.l.b16 %v77
    %v334 = vunpack.c.l.b16 %v78
    %v335 = vunpack.c.l.b16 %v79
    %v336 = vunpack.c.l.b16 %v80
    %v337 = vunpack.c.l.b16 %v81
    %v338 = vunpack.c.l.b16 %v82
    %v339 = vunpack.c.l.b16 %v83
    %v340 = vunpack.c.l.b16 %v84
    %v341 = vunpack.c.l.b16 %v85
    %v342 = vunpack.c.l.b16 %v86
    %v343 = vunpack.c.l.b16 %v87
    %v344 = vunpack.c.l.b16 %v88
    %v345 = vunpack.c.l.b16 %v89
    %v346 = vunpack.c.l.b16 %v90
    %v347 = vunpack.c.l.b16 %v91
    %v348 = vunpack.c.l.b16 %v92
    %v349 = vunpack.c.l.b16 %v93
    %v350 = vunpack.c.l.b16 %v94
    %v351 = vunpack.c.l.b16 %v95
    %v352 = vunpack.c.l.b16 %v96
    %v353 = vunpack.c.l.b16 %v97
    %v354 = vunpack.c.l.b16 %v98
    %v355 = vunpack.c.l.b16 %v99
    %v356 = vunpack.c.l.b16 %v100
    %v357 = vunpack.c.l.b16 %v101
    %v358 = vunpack.c.l.b16 %v102
    %v359 = vunpack.c.l.b16 %v103
    %v360 = vunpack.c.l.b16 %v104
    %v361 = vunpack.c.l.b16 %v105
    %v362 = vunpack.c.l.b16 %v106
    %v363 = vunpack.c.l.b16 %v107
    %v364 = vunpack.c.l.b16 %v108
    %v365 = vunpack.c.l.b16 %v109
    %v366 = vunpack.c.l.b16 %v110
    %v367 = vunpack.c.l.b16 %v111
    %v368 = vunpack.c.l.b16 %v112
    %v369 = vunpack.c.l.b16 %v113
    %v370 = vunpack.c.l.b16 %v114
    %v371 = vunpack.c.l.b16 %v115
    %v372 = vunpack.c.l.b16 %v116
    %v373 = vunpack.c.l.b16 %v117
    %v374 = vunpack.c.l.b16 %v118
    %v375 = vunpack.c.l.b16 %v119
    %v376 = vunpack.c.l.b16 %v120
    %v377 = vunpack.c.l.b16 %v121
    %v378 = vunpack.c.l.b16 %v122
    %v379 = vunpack.c.l.b16 %v123
    %v380 = vunpack.c.l.b16 %v124
    %v381 = vunpack.c.l.b16 %v125
    %v382 = vunpack.c.l.b16 %v126
    %v383 = vunpack.c.l.b16 %v127
    %v384 = vunpack.c.l.b16 %v128
    %v385 = vunpack.c.l.b16 %v129
    %v386 = vunpack.c.l.b16 %v130
    %v387 = vunpack.c.l.b16 %v131
    %v388 = vunpack.c.l.b16 %v132
    %v389 = vunpack.c.l.b16 %v133
    %v390 = vunpack.c.l.b16 %v134
    %v391 = vunpack.c.l.b16 %v135
    %v392 = vunpack.c.l.b16 %v136
    %v393 = vunpack.c.l.b16 %v137
    %v394 = vunpack.c.l.b16 %v138
    %v395 = vunpack.c.l.b16 %v139
    %v396 = vunpack.c.l.b16 %v140
    %v397 = vunpack.c.l.b16 %v141
    %v398 = vunpack.c.l.b16 %v142
    %v399 = vunpack.c.l.b16 %v143
    %v400 = vunpack.c.l.b16 %v144
    %v401 = vunpack.c.l.b16 %v145
    %v402 = vunpack.c.l.b16 %v146
    %v403 = vunpack.c.l.b16 %v147
    %v404 = vunpack.c.l.b16 %v148
    %v405 = vunpack.c.l.b16 %v149
    %v406 = vunpack.c.l.b16 %v150
    %v407 = vunpack.c.l.b16 %v151
    %v408 = vunpack.c.l.b16 %v152
    %v409 = vunpack.c.l.b16 %v153
    %v410 = vunpack.c.l.b16 %v154
    %v411 = vunpack.c.l.b16 %v155
    %v412 = vunpack.c.l.b16 %v156
    %v413 = vunpack.c.l.b16 %v157
    %v414 = vunpack.c.l.b16 %v158
    %v415 = vunpack.c.l.b16 %v159
    %v416 = vunpack.c.l.b16 %v160
    %v417 = vunpack.c.l.b16 %v161
    %v418 = vunpack.c.l.b16 %v162
    %v419 = vunpack.c.l.b16 %v163
    %v420 = vunpack.c.l.b16 %v164
    %v421 = vunpack.c.l.b16 %v165
    %v422 = vunpack.c.l.b16 %v166
    %v423 = vunpack.c.l.b16 %v167
    %v424 = vunpack.c.l.b16 %v168
    %v425 = vunpack.c.l.b16 %v169
    %v426 = vpack.c.b16 %v315, %v314
    %v427 = vpack.c.b16 %v317, %v316
    %v428 = vpack.c.b16 %v319, %v318
    %v429 = vpack.c.b16 %v321, %v320
    %v430 = vpack.c.b16 %v323, %v322
    %v431 = vpack.c.b16 %v325, %v324
    %v432 = vpack.c.b16 %v327, %v326
    %v433 = vpack.c.b16 %v329, %v328
    %v434 = vpack.c.b16 %v331, %v330
    %v435 = vpack.c.b16 %v333, %v332
    %v436 = vpack.c.b16 %v335, %v334
    %v437 = vpack.c.b16 %v337, %v336
    %v438 = vpack.c.b16 %v339, %v338
    %v439 = vpack.c.b16 %v341, %v340
    %v440 = vpack.c.b16 %v343, %v342
    %v441 = vpack.c.b16 %v345, %v344
    %v442 = vpack.c.b16 %v347, %v346
    %v443 = vpack.c.b16 %v349, %v348
    %v444 = vpack.c.b16 %v351, %v350
    %v445 = vpack.c.b16 %v353, %v352
    %v446 = vpack.c.b16 %v355, %v354
    %v447 = vpack.c.b16 %v357, %v356
    %v448 = vpack.c.b16 %v359, %v358
    %v449 = vpack.c.b16 %v361, %v360
    %v450 = vpack.c.b16 %v363, %v362
    %v451 = vpack.c.b16 %v365, %v364
    %v452 = vpack.c.b16 %v367, %v366
    %v453 = vpack.c.b16 %v369, %v368
    %v454 = vpack.c.b16 %v371, %v370
    %v455 = vpack.c.b16 %v373, %v372
    %v456 = vpack.c.b16 %v375, %v374
    %v457 = vpack.c.b16 %v377, %v376
    %v458 = vpack.c.b16 %v379, %v378
    %v459 = vpack.c.b16 %v381, %v380
    %v460 = vpack.c.b16 %v383, %v382
    %v461 = vpack.c.b16 %v385, %v384
    %v462 = vpack.c.b16 %v387, %v386
    %v463 = vpack.c.b16 %v389, %v388
    %v464 = vpack.c.b16 %v391, %v390
    %v465 = vpack.c.b16 %v393, %v392
    %v466 = vpack.c.b16 %v395, %v394
    %v467 = vpack.c.b16 %v397, %v396
    %v468 = vpack.c.b16 %v399, %v398
    %v469 = vpack.c.b16 %v401, %v400
    %v470 = vpack.c.b16 %v403, %v402
    %v471 = vpack.c.b16 %v405, %v404
    %v472 = vpack.c.b16 %v407, %v406
    %v473 = vpack.c.b16 %v409, %v408
    %v474 = vpack.c.b16 %v411, %v410
    %v475 = vpack.c.b16 %v413, %v412
    %v476 = vpack.c.b16 %v415, %v414
    %v477 = vpack.c.b16 %v417, %v416
    %v478 = vpack.c.b16 %v419, %v418
    %v479 = vpack.c.b16 %v421, %v420
    %v480 = vpack.c.b16 %v423, %v422
    %v481 = vpack.c.b16 %v425, %v424
    %538 = vmatprep.subr.bf16.mxu0 0
    %539 = vmatpush1.bf16.msra.mxu0 %v433
    %540 = vmatprep.subr.bf16.mxu0 0
    %541 = vmatpush1.bf16.msra.mxu0 %v432
    %542 = vmatprep.subr.bf16.mxu0 0
    %543 = vmatpush1.bf16.msra.mxu0 %v431
    %544 = vmatprep.subr.bf16.mxu0 0
    %545 = vmatpush1.bf16.msra.mxu0 %v430
    %546 = vmatprep.subr.bf16.mxu0 0
    %547 = vmatpush1.bf16.msra.mxu0 %v429
    %548 = vmatprep.subr.bf16.mxu0 0
    %549 = vmatpush1.bf16.msra.mxu0 %v428
    %550 = vmatprep.subr.bf16.mxu0 0
    %551 = vmatpush1.bf16.msra.mxu0 %v427
    %552 = vmatprep.subr.bf16.mxu0 0
    %553 = vmatpush1.bf16.msra.mxu0 %v426
    %554 = vmatprep.subr.bf16.mxu0 0
    %555 = vmatpush2.bf16.msra.mxu0 %v441
    %556 = vmatprep.subr.bf16.mxu0 0
    %557 = vmatpush2.bf16.msra.mxu0 %v440
    %558 = vmatprep.subr.bf16.mxu0 0
    %559 = vmatpush2.bf16.msra.mxu0 %v439
    %560 = vmatprep.subr.bf16.mxu0 0
    %561 = vmatpush2.bf16.msra.mxu0 %v438
    %562 = vmatprep.subr.bf16.mxu0 0
    %563 = vmatpush2.bf16.msra.mxu0 %v437
    %564 = vmatprep.subr.bf16.mxu0 0
    %565 = vmatpush2.bf16.msra.mxu0 %v436
    %566 = vmatprep.subr.bf16.mxu0 0
    %567 = vmatpush2.bf16.msra.mxu0 %v435
    %568 = vmatprep.subr.bf16.mxu0 0
    %569 = vmatpush2.bf16.msra.mxu0 %v434
    %570 = vmatprep.mubr.bf16.mxu0 %v189
    %571 = vmatmul.mubr.bf16.gmra.mxu0 %v188
    %v572 = vpop.f32.mrf.mxu0
    %v573 = vadd.f32 %v175, %v572
    %v574 = vpop.f32.mrf.mxu0
    %v575 = vpop.f32.mrf.mxu0
    %v576 = vpop.f32.mrf.mxu0
    %577 = vdwg.mxu0
    %578 = vmatprep.subr.bf16.mxu0 0
    %579 = vmatpush1.bf16.msra.mxu0 %v449
    %580 = vmatprep.subr.bf16.mxu0 0
    %581 = vmatpush1.bf16.msra.mxu0 %v448
    %582 = vmatprep.subr.bf16.mxu0 0
    %583 = vmatpush1.bf16.msra.mxu0 %v447
    %584 = vmatprep.subr.bf16.mxu0 0
    %585 = vmatpush1.bf16.msra.mxu0 %v446
    %586 = vmatprep.subr.bf16.mxu0 0
    %587 = vmatpush1.bf16.msra.mxu0 %v445
    %588 = vmatprep.subr.bf16.mxu0 0
    %589 = vmatpush1.bf16.msra.mxu0 %v444
    %590 = vmatprep.subr.bf16.mxu0 0
    %591 = vmatpush1.bf16.msra.mxu0 %v443
    %592 = vmatprep.subr.bf16.mxu0 0
    %593 = vmatpush1.bf16.msra.mxu0 %v442
    %594 = vmatprep.subr.bf16.mxu0 0
    %595 = vmatpush2.bf16.msra.mxu0 %v457
    %596 = vmatprep.subr.bf16.mxu0 0
    %597 = vmatpush2.bf16.msra.mxu0 %v456
    %598 = vmatprep.subr.bf16.mxu0 0
    %599 = vmatpush2.bf16.msra.mxu0 %v455
    %600 = vmatprep.subr.bf16.mxu0 0
    %601 = vmatpush2.bf16.msra.mxu0 %v454
    %602 = vmatprep.subr.bf16.mxu0 0
    %603 = vmatpush2.bf16.msra.mxu0 %v453
    %604 = vmatprep.subr.bf16.mxu0 0
    %605 = vmatpush2.bf16.msra.mxu0 %v452
    %606 = vmatprep.subr.bf16.mxu0 0
    %607 = vmatpush2.bf16.msra.mxu0 %v451
    %608 = vmatprep.subr.bf16.mxu0 0
    %609 = vmatpush2.bf16.msra.mxu0 %v450
    %610 = vmatprep.mubr.bf16.mxu0 %v191
    %611 = vmatmul.mubr.bf16.gmra.mxu0 %v190
    %v612 = vpop.f32.mrf.mxu0
    %v613 = vadd.f32 %v573, %v612
    %v614 = vpop.f32.mrf.mxu0
    %v615 = vpop.f32.mrf.mxu0
    %v616 = vpop.f32.mrf.mxu0
    %617 = vdwg.mxu0
    %618 = vmatprep.subr.bf16.mxu0 0
    %619 = vmatpush1.bf16.msra.mxu0 %v465
    %620 = vmatprep.subr.bf16.mxu0 0
    %621 = vmatpush1.bf16.msra.mxu0 %v464
    %622 = vmatprep.subr.bf16.mxu0 0
    %623 = vmatpush1.bf16.msra.mxu0 %v463
    %624 = vmatprep.subr.bf16.mxu0 0
    %625 = vmatpush1.bf16.msra.mxu0 %v462
    %626 = vmatprep.subr.bf16.mxu0 0
    %627 = vmatpush1.bf16.msra.mxu0 %v461
    %628 = vmatprep.subr.bf16.mxu0 0
    %629 = vmatpush1.bf16.msra.mxu0 %v460
    %630 = vmatprep.subr.bf16.mxu0 0
    %631 = vmatpush1.bf16.msra.mxu0 %v459
    %632 = vmatprep.subr.bf16.mxu0 0
    %633 = vmatpush1.bf16.msra.mxu0 %v458
    %634 = vmatprep.subr.bf16.mxu0 0
    %635 = vmatpush2.bf16.msra.mxu0 %v473
    %636 = vmatprep.subr.bf16.mxu0 0
    %637 = vmatpush2.bf16.msra.mxu0 %v472
    %638 = vmatprep.subr.bf16.mxu0 0
    %639 = vmatpush2.bf16.msra.mxu0 %v471
    %640 = vmatprep.subr.bf16.mxu0 0
    %641 = vmatpush2.bf16.msra.mxu0 %v470
    %642 = vmatprep.subr.bf16.mxu0 0
    %643 = vmatpush2.bf16.msra.mxu0 %v469
    %644 = vmatprep.subr.bf16.mxu0 0
    %645 = vmatpush2.bf16.msra.mxu0 %v468
    %646 = vmatprep.subr.bf16.mxu0 0
    %647 = vmatpush2.bf16.msra.mxu0 %v467
    %648 = vmatprep.subr.bf16.mxu0 0
    %649 = vmatpush2.bf16.msra.mxu0 %v466
    %650 = vmatprep.mubr.bf16.mxu0 %v193
    %651 = vmatmul.mubr.bf16.gmra.mxu0 %v192
    %v652 = vpop.f32.mrf.mxu0
    %v653 = vadd.f32 %v613, %v652
    %v654 = vpop.f32.mrf.mxu0
    %v655 = vpop.f32.mrf.mxu0
    %v656 = vpop.f32.mrf.mxu0
    %657 = vdwg.mxu0
    %658 = vmatprep.subr.bf16.mxu0 0
    %659 = vmatpush1.bf16.msra.mxu0 %v481
    %660 = vmatprep.subr.bf16.mxu0 0
    %661 = vmatpush1.bf16.msra.mxu0 %v480
    %662 = vmatprep.subr.bf16.mxu0 0
    %663 = vmatpush1.bf16.msra.mxu0 %v479
    %664 = vmatprep.subr.bf16.mxu0 0
    %665 = vmatpush1.bf16.msra.mxu0 %v478
    %666 = vmatprep.subr.bf16.mxu0 0
    %667 = vmatpush1.bf16.msra.mxu0 %v477
    %668 = vmatprep.subr.bf16.mxu0 0
    %669 = vmatpush1.bf16.msra.mxu0 %v476
    %670 = vmatprep.subr.bf16.mxu0 0
    %671 = vmatpush1.bf16.msra.mxu0 %v475
    %672 = vmatprep.subr.bf16.mxu0 0
    %673 = vmatpush1.bf16.msra.mxu0 %v474
    %674 = vmatprep.subr.bf16.mxu0 0
    %675 = vmatpush2.bf16.msra.mxu0 0
    %676 = vmatprep.subr.bf16.mxu0 0
    %677 = vmatpush2.bf16.msra.mxu0 0
    %678 = vmatprep.subr.bf16.mxu0 0
    %679 = vmatpush2.bf16.msra.mxu0 0
    %680 = vmatprep.subr.bf16.mxu0 0
    %681 = vmatpush2.bf16.msra.mxu0 0
    %682 = vmatprep.subr.bf16.mxu0 0
    %683 = vmatpush2.bf16.msra.mxu0 0
    %684 = vmatprep.subr.bf16.mxu0 0
    %685 = vmatpush2.bf16.msra.mxu0 0
    %686 = vmatprep.subr.bf16.mxu0 0
    %687 = vmatpush2.bf16.msra.mxu0 0
    %688 = vmatprep.subr.bf16.mxu0 0
    %689 = vmatpush2.bf16.msra.mxu0 0
    %690 = vmatprep.mubr.bf16.mxu0 0
    %691 = vmatmul.mubr.bf16.gmra.mxu0 %v194
    %v692 = vpop.f32.mrf.mxu0
    %v693 = vadd.f32 %v653, %v692
    %v694 = vpop.f32.mrf.mxu0
    %v695 = vpop.f32.mrf.mxu0
    %v696 = vpop.f32.mrf.mxu0
    %697 = vdwg.mxu0
    %v698 = vmax.f32 %v693, 0.0
    %v699 = vpack.c.bf16 %v698, %v698
    %v700 = vld [vmem:[%s3] sm:$0xf]
    %v701 = vld [vmem:[%s3 + $0x4] sm:$0xf]
    %v702 = vld [vmem:[%s3 + $0x8] sm:$0xf]
    %v703 = vld [vmem:[%s3 + $0xc] sm:$0xf]
    %v704 = vld [vmem:[%s3 + $0x10] sm:$0xf]
    %v705 = vld [vmem:[%s3 + $0x14] sm:$0xf]
    %v706 = vld [vmem:[%s3 + $0x18] sm:$0xf]
    %v707 = vld [vmem:[%s3 + $0x1c] sm:$0xf]
    %v708 = vld [vmem:[%s3 + $0x20] sm:$0xf]
    %v709 = vld [vmem:[%s3 + $0x24] sm:$0xf]
    %v710 = vld [vmem:[%s3 + $0x28] sm:$0xf]
    %v711 = vld [vmem:[%s3 + $0x2c] sm:$0xf]
    %v712 = vld [vmem:[%s3 + $0x30] sm:$0xf]
    %v713 = vld [vmem:[%s3 + $0x34] sm:$0xf]
    %v714 = vld [vmem:[%s3 + $0x38] sm:$0xf]
    %v715 = vld [vmem:[%s3 + $0x3c] sm:$0xf]
    %v716 = vld [vmem:[%s4] sm:$0x1]
    %v718 = vlaneseq
    %v719 = vshrl.u32 %v718, 7
    %v720 = vsub.s32 0, %v719
    %v721 = vrot.slane %v716, %v720
    %v739 = vunpack.c.l.b16 %v700
    %v740 = vunpack.c.l.b16 %v701
    %v741 = vunpack.c.l.b16 %v702
    %v742 = vunpack.c.l.b16 %v703
    %v743 = vunpack.c.l.b16 %v704
    %v744 = vunpack.c.l.b16 %v705
    %v745 = vunpack.c.l.b16 %v706
    %v746 = vunpack.c.l.b16 %v707
    %v747 = vunpack.c.l.b16 %v708
    %v748 = vunpack.c.l.b16 %v709
    %v749 = vunpack.c.l.b16 %v710
    %v750 = vunpack.c.l.b16 %v711
    %v751 = vunpack.c.l.b16 %v712
    %v752 = vunpack.c.l.b16 %v713
    %v753 = vunpack.c.l.b16 %v714
    %v754 = vunpack.c.l.b16 %v715
    %v755 = vpack.c.b16 %v740, %v739
    %v756 = vpack.c.b16 %v742, %v741
    %v757 = vpack.c.b16 %v744, %v743
    %v758 = vpack.c.b16 %v746, %v745
    %v759 = vpack.c.b16 %v748, %v747
    %v760 = vpack.c.b16 %v750, %v749
    %v761 = vpack.c.b16 %v752, %v751
    %v762 = vpack.c.b16 %v754, %v753
    %771 = vmatprep.subr.bf16.mxu0 0
    %772 = vmatpush1.bf16.msra.mxu0 %v762
    %773 = vmatprep.subr.bf16.mxu0 0
    %774 = vmatpush1.bf16.msra.mxu0 %v761
    %775 = vmatprep.subr.bf16.mxu0 0
    %776 = vmatpush1.bf16.msra.mxu0 %v760
    %777 = vmatprep.subr.bf16.mxu0 0
    %778 = vmatpush1.bf16.msra.mxu0 %v759
    %779 = vmatprep.subr.bf16.mxu0 0
    %780 = vmatpush1.bf16.msra.mxu0 %v758
    %781 = vmatprep.subr.bf16.mxu0 0
    %782 = vmatpush1.bf16.msra.mxu0 %v757
    %783 = vmatprep.subr.bf16.mxu0 0
    %784 = vmatpush1.bf16.msra.mxu0 %v756
    %785 = vmatprep.subr.bf16.mxu0 0
    %786 = vmatpush1.bf16.msra.mxu0 %v755
    %787 = vmatprep.subr.bf16.mxu0 0
    %788 = vmatpush2.bf16.msra.mxu0 0
    %789 = vmatprep.subr.bf16.mxu0 0
    %790 = vmatpush2.bf16.msra.mxu0 0
    %791 = vmatprep.subr.bf16.mxu0 0
    %792 = vmatpush2.bf16.msra.mxu0 0
    %793 = vmatprep.subr.bf16.mxu0 0
    %794 = vmatpush2.bf16.msra.mxu0 0
    %795 = vmatprep.subr.bf16.mxu0 0
    %796 = vmatpush2.bf16.msra.mxu0 0
    %797 = vmatprep.subr.bf16.mxu0 0
    %798 = vmatpush2.bf16.msra.mxu0 0
    %799 = vmatprep.subr.bf16.mxu0 0
    %800 = vmatpush2.bf16.msra.mxu0 0
    %801 = vmatprep.subr.bf16.mxu0 0
    %802 = vmatpush2.bf16.msra.mxu0 0
    %803 = vmatprep.mubr.bf16.mxu0 0
    %804 = vmatmul.mubr.bf16.gmra.mxu0 %v699
    %v805 = vpop.f32.mrf.mxu0
    %v806 = vadd.f32 %v721, %v805
    %v807 = vpop.f32.mrf.mxu0
    %v808 = vpop.f32.mrf.mxu0
    %v809 = vpop.f32.mrf.mxu0
    %810 = vdwg.mxu0
    %v811 = vmax.f32 %v806, 0.0
    %v812 = vpack.c.bf16 %v811, %v811
    %v813 = vld [vmem:[%s5] sm:$0xf]
    %v814 = vld [vmem:[%s5 + $0x4] sm:$0xf]
    %v815 = vld [vmem:[%s5 + $0x8] sm:$0xf]
    %v816 = vld [vmem:[%s5 + $0xc] sm:$0xf]
    %v817 = vld [vmem:[%s5 + $0x10] sm:$0xf]
    %v818 = vld [vmem:[%s5 + $0x14] sm:$0xf]
    %v819 = vld [vmem:[%s5 + $0x18] sm:$0xf]
    %v820 = vld [vmem:[%s5 + $0x1c] sm:$0xf]
    %v821 = vld [vmem:[%s6] sm:$0x1]
    %v823 = vlaneseq
    %v824 = vshrl.u32 %v823, 7
    %v825 = vsub.s32 0, %v824
    %v826 = vrot.slane %v821, %v825
    %v836 = vunpack.c.l.b16 %v813
    %v837 = vunpack.c.l.b16 %v814
    %v838 = vunpack.c.l.b16 %v815
    %v839 = vunpack.c.l.b16 %v816
    %v840 = vunpack.c.l.b16 %v817
    %v841 = vunpack.c.l.b16 %v818
    %v842 = vunpack.c.l.b16 %v819
    %v843 = vunpack.c.l.b16 %v820
    %v844 = vpack.c.b16 %v837, %v836
    %v845 = vpack.c.b16 %v839, %v838
    %v846 = vpack.c.b16 %v841, %v840
    %v847 = vpack.c.b16 %v843, %v842
    %vm852 = vcmask 523264
    %v854 = vsel %vm852, %v812, 0
    %856 = vmatprep.subr.bf16.mxu0 0
    %857 = vmatpush1.bf16.msra.mxu0 0
    %858 = vmatprep.subr.bf16.mxu0 0
    %859 = vmatpush1.bf16.msra.mxu0 0
    %860 = vmatprep.subr.bf16.mxu0 0
    %861 = vmatpush1.bf16.msra.mxu0 0
    %862 = vmatprep.subr.bf16.mxu0 0
    %863 = vmatpush1.bf16.msra.mxu0 0
    %864 = vmatprep.subr.bf16.mxu0 0
    %865 = vmatpush1.bf16.msra.mxu0 %v847
    %866 = vmatprep.subr.bf16.mxu0 0
    %867 = vmatpush1.bf16.msra.mxu0 %v846
    %868 = vmatprep.subr.bf16.mxu0 0
    %869 = vmatpush1.bf16.msra.mxu0 %v845
    %870 = vmatprep.subr.bf16.mxu0 0
    %871 = vmatpush1.bf16.msra.mxu0 %v844
    %872 = vmatprep.subr.bf16.mxu0 0
    %873 = vmatpush2.bf16.msra.mxu0 0
    %874 = vmatprep.subr.bf16.mxu0 0
    %875 = vmatpush2.bf16.msra.mxu0 0
    %876 = vmatprep.subr.bf16.mxu0 0
    %877 = vmatpush2.bf16.msra.mxu0 0
    %878 = vmatprep.subr.bf16.mxu0 0
    %879 = vmatpush2.bf16.msra.mxu0 0
    %880 = vmatprep.subr.bf16.mxu0 0
    %881 = vmatpush2.bf16.msra.mxu0 0
    %882 = vmatprep.subr.bf16.mxu0 0
    %883 = vmatpush2.bf16.msra.mxu0 0
    %884 = vmatprep.subr.bf16.mxu0 0
    %885 = vmatpush2.bf16.msra.mxu0 0
    %886 = vmatprep.subr.bf16.mxu0 0
    %887 = vmatpush2.bf16.msra.mxu0 0
    %888 = vmatprep.mubr.bf16.mxu0 0
    %889 = vmatmul.mubr.bf16.gmra.mxu0 %v854
    %v890 = vpop.f32.mrf.mxu0
    %v891 = vadd.f32 %v826, %v890
    %v892 = vpop.f32.mrf.mxu0
    %v893 = vpop.f32.mrf.mxu0
    %v894 = vpop.f32.mrf.mxu0
    %895 = vdwg.mxu0
    %v896 = vmax.f32 %v891, 0.0
    %v897 = vpack.c.bf16 %v896, %v896
    %v898 = vld [vmem:[%s7] sm:$0xf]
    %v899 = vld [vmem:[%s7 + $0x4] sm:$0xf]
    %v900 = vld [vmem:[%s7 + $0x8] sm:$0xf]
    %v901 = vld [vmem:[%s7 + $0xc] sm:$0xf]
    %v902 = vld [vmem:[%s8] sm:$0x1]
    %v904 = vlaneseq
    %v905 = vshrl.u32 %v904, 7
    %v906 = vsub.s32 0, %v905
    %v907 = vrot.slane %v902, %v906
    %v913 = vunpack.c.l.b16 %v898
    %v914 = vunpack.c.l.b16 %v899
    %v915 = vunpack.c.l.b16 %v900
    %v916 = vunpack.c.l.b16 %v901
    %v917 = vpack.c.b16 %v914, %v913
    %v918 = vpack.c.b16 %v916, %v915
    %vm921 = vcmask 261120
    %v923 = vsel %vm921, %v897, 0
    %925 = vmatprep.subr.bf16.mxu0 0
    %926 = vmatpush1.bf16.msra.mxu0 0
    %927 = vmatprep.subr.bf16.mxu0 0
    %928 = vmatpush1.bf16.msra.mxu0 0
    %929 = vmatprep.subr.bf16.mxu0 0
    %930 = vmatpush1.bf16.msra.mxu0 0
    %931 = vmatprep.subr.bf16.mxu0 0
    %932 = vmatpush1.bf16.msra.mxu0 0
    %933 = vmatprep.subr.bf16.mxu0 0
    %934 = vmatpush1.bf16.msra.mxu0 0
    %935 = vmatprep.subr.bf16.mxu0 0
    %936 = vmatpush1.bf16.msra.mxu0 0
    %937 = vmatprep.subr.bf16.mxu0 0
    %938 = vmatpush1.bf16.msra.mxu0 %v918
    %939 = vmatprep.subr.bf16.mxu0 0
    %940 = vmatpush1.bf16.msra.mxu0 %v917
    %941 = vmatprep.subr.bf16.mxu0 0
    %942 = vmatpush2.bf16.msra.mxu0 0
    %943 = vmatprep.subr.bf16.mxu0 0
    %944 = vmatpush2.bf16.msra.mxu0 0
    %945 = vmatprep.subr.bf16.mxu0 0
    %946 = vmatpush2.bf16.msra.mxu0 0
    %947 = vmatprep.subr.bf16.mxu0 0
    %948 = vmatpush2.bf16.msra.mxu0 0
    %949 = vmatprep.subr.bf16.mxu0 0
    %950 = vmatpush2.bf16.msra.mxu0 0
    %951 = vmatprep.subr.bf16.mxu0 0
    %952 = vmatpush2.bf16.msra.mxu0 0
    %953 = vmatprep.subr.bf16.mxu0 0
    %954 = vmatpush2.bf16.msra.mxu0 0
    %955 = vmatprep.subr.bf16.mxu0 0
    %956 = vmatpush2.bf16.msra.mxu0 0
    %957 = vmatprep.mubr.bf16.mxu0 0
    %958 = vmatmul.mubr.bf16.gmra.mxu0 %v923
    %v959 = vpop.f32.mrf.mxu0
    %v960 = vadd.f32 %v907, %v959
    %v961 = vpop.f32.mrf.mxu0
    %v962 = vpop.f32.mrf.mxu0
    %v963 = vpop.f32.mrf.mxu0
    %964 = vdwg.mxu0
    %v965 = vmax.f32 %v960, 0.0
    %v966 = vpack.c.bf16 %v965, %v965
    %v967 = vld [vmem:[%s9] sm:$0xf]
    %v968 = vld [vmem:[%s9 + $0x4] sm:$0xf]
    %v969 = vld [vmem:[%s10] sm:$0x1]
    %v971 = vlaneseq
    %v972 = vshrl.u32 %v971, 7
    %v973 = vsub.s32 0, %v972
    %v974 = vrot.slane %v969, %v973
    %v978 = vunpack.c.l.b16 %v967
    %v979 = vunpack.c.l.b16 %v968
    %v980 = vpack.c.b16 %v979, %v978
    %vm982 = vcmask 130048
    %v984 = vsel %vm982, %v966, 0
    %986 = vmatprep.subr.bf16.mxu0 0
    %987 = vmatpush1.bf16.msra.mxu0 0
    %988 = vmatprep.subr.bf16.mxu0 0
    %989 = vmatpush1.bf16.msra.mxu0 0
    %990 = vmatprep.subr.bf16.mxu0 0
    %991 = vmatpush1.bf16.msra.mxu0 0
    %992 = vmatprep.subr.bf16.mxu0 0
    %993 = vmatpush1.bf16.msra.mxu0 0
    %994 = vmatprep.subr.bf16.mxu0 0
    %995 = vmatpush1.bf16.msra.mxu0 0
    %996 = vmatprep.subr.bf16.mxu0 0
    %997 = vmatpush1.bf16.msra.mxu0 0
    %998 = vmatprep.subr.bf16.mxu0 0
    %999 = vmatpush1.bf16.msra.mxu0 0
    %1000 = vmatprep.subr.bf16.mxu0 0
    %1001 = vmatpush1.bf16.msra.mxu0 %v980
    %1002 = vmatprep.subr.bf16.mxu0 0
    %1003 = vmatpush2.bf16.msra.mxu0 0
    %1004 = vmatprep.subr.bf16.mxu0 0
    %1005 = vmatpush2.bf16.msra.mxu0 0
    %1006 = vmatprep.subr.bf16.mxu0 0
    %1007 = vmatpush2.bf16.msra.mxu0 0
    %1008 = vmatprep.subr.bf16.mxu0 0
    %1009 = vmatpush2.bf16.msra.mxu0 0
    %1010 = vmatprep.subr.bf16.mxu0 0
    %1011 = vmatpush2.bf16.msra.mxu0 0
    %1012 = vmatprep.subr.bf16.mxu0 0
    %1013 = vmatpush2.bf16.msra.mxu0 0
    %1014 = vmatprep.subr.bf16.mxu0 0
    %1015 = vmatpush2.bf16.msra.mxu0 0
    %1016 = vmatprep.subr.bf16.mxu0 0
    %1017 = vmatpush2.bf16.msra.mxu0 0
    %1018 = vmatprep.mubr.bf16.mxu0 0
    %1019 = vmatmul.mubr.bf16.gmra.mxu0 %v984
    %v1020 = vpop.f32.mrf.mxu0
    %v1021 = vadd.f32 %v974, %v1020
    %v1022 = vpop.f32.mrf.mxu0
    %v1023 = vpop.f32.mrf.mxu0
    %v1024 = vpop.f32.mrf.mxu0
    %1025 = vdwg.mxu0
    %1026 = vst [vmem:[#allocation5] sm:$0xff] %v1021
    // Predicated region
    $region50: #{tpu_custom_call.1} parent=1 // pred_check
      _
    $region51: #{tpu_custom_call.1} parent=1 // pred_check_branch
      %1028 = sbr.rel (0) target = $region53
    $region52: #{tpu_custom_call.1} parent=1 // pred_region
      %s1030 = ssub.s32 128, 128
      %1031 = vsyncadd [#allocation4], %s1030
      %s1033 = sshll.u32 [#allocation5], 4
      %s1034 = int_to_ptr.vmem [resolvable:$true] %s1033
      %1036 = dma.vmem_to_hbm [thread:$0]  %s1034, 128, %s11, [#allocation4]
    $region53: #{tpu_custom_call.1} parent=1 // pred_fallthru
      _
    // Predicated region
    $region54: #{tpu_custom_call.1} parent=1 // pred_check
      _
    $region55: #{tpu_custom_call.1} parent=1 // pred_check_branch
      %1038 = sbr.rel (0) target = $region57
    $region56: #{tpu_custom_call.1} parent=1 // pred_region
      %1039 = dma.done [#allocation4], 128
    $region57: #{tpu_custom_call.1} parent=1 // pred_fallthru
      _
    %1040 = vsyncpa [#allocation3], 1
    %1041 = vsyncpa [#allocation4], 1

</llo_original>
